<compile_context>
chip_gen: v7x
topology: tpu7x:2x2x1
jax: 0.10.0
libtpu: 0.0.40
codegen_flags: <defaults>
</compile_context>

<pallas_src>
import functools

import jax
import jax.numpy as jnp
from jax.experimental import pallas as pl
from jax.experimental.pallas import tpu as pltpu

_LANE = 128
_SUBLANE = 8


def _round_up(x, m):
    return ((x + m - 1) // m) * m


# ----------------------------- Pallas kernel -------------------------------


def _make_mlp_kernel(two_layers: bool, with_action: bool):
    """Fused MLP forward, optionally with the action gather fused in.

    Ref order: state, [action], w1, [w2], wq, bias_stack, out
    bias_stack rows: 0 -> b1, 1 -> b2 (zeros if unused), 2 -> bq.
    All feature/output dims are pre-padded to lane width (128).
    """

    def kernel(*refs):
        it = iter(refs)
        x_ref = next(it)
        act_ref = next(it) if with_action else None
        w1_ref = next(it)
        w2_ref = next(it) if two_layers else None
        wq_ref = next(it)
        b_ref = next(it)
        out_ref = next(it)

        pf = w1_ref.shape[1]   # padded n_features (multiple of 128)
        po = wq_ref.shape[1]   # padded n_output   (multiple of 128)

        x = x_ref[...]                                               # (TB, n_in) f32
        h = jnp.dot(x, w1_ref[...], preferred_element_type=jnp.float32)
        h = jnp.maximum(h + b_ref[0:1, 0:pf], 0.0)
        if two_layers:
            h = jnp.dot(h, w2_ref[...], preferred_element_type=jnp.float32)
            h = jnp.maximum(h + b_ref[1:2, 0:pf], 0.0)
        q = jnp.dot(h, wq_ref[...], preferred_element_type=jnp.float32)
        q = q + b_ref[2:3, 0:po]                                     # (TB, po)

        if with_action:
            act = act_ref[...]                                       # (TB, 1) int32
            col = jax.lax.broadcasted_iota(jnp.int32, q.shape, 1)
            q_sel = jnp.sum(jnp.where(col == act, q, 0.0), axis=1, keepdims=True)
            out_ref[...] = q_sel.astype(out_ref.dtype)
        else:
            out_ref[...] = q.astype(out_ref.dtype)

    return kernel


# ------------------------------ wrapper -------------------------------------


@functools.partial(jax.jit, static_argnames=("n_output", "two_layers"))
def network_forward(state, params, action=None, *, n_output, two_layers=True):
    """Pallas-backed forward pass mirroring Network.forward."""
    state = state.astype(jnp.float32)            # torch: state.float()
    batch, n_in = state.shape
    pf = params["w1"].shape[1]
    po = params["wq"].shape[1]
    with_action = action is not None

    # Batch tiling: sublane-aligned tile; grid over batch is "parallel" so it
    # shards across v7x's two TensorCores when batches are large.
    tb = _LANE if batch >= _LANE else _round_up(batch, _SUBLANE)
    b_pad = _round_up(batch, tb)
    if b_pad != batch:
        state = jnp.pad(state, ((0, b_pad - batch), (0, 0)))
    grid = (b_pad // tb,)

    args = [state]
    in_specs = [pl.BlockSpec((tb, n_in), lambda i: (i, 0))]
    if with_action:
        act = jnp.reshape(action.astype(jnp.int32), (batch, 1))
        if b_pad != batch:
            act = jnp.pad(act, ((0, b_pad - batch), (0, 0)))
        args.append(act)
        in_specs.append(pl.BlockSpec((tb, 1), lambda i: (i, 0)))

    # Weights / biases: constant index_map -> DMA'd once, VMEM-resident.
    args.append(params["w1"])
    in_specs.append(pl.BlockSpec(params["w1"].shape, lambda i: (0, 0)))
    if two_layers:
        args.append(params["w2"])
        in_specs.append(pl.BlockSpec(params["w2"].shape, lambda i: (0, 0)))
    args.append(params["wq"])
    in_specs.append(pl.BlockSpec(params["wq"].shape, lambda i: (0, 0)))
    args.append(params["bias"])
    in_specs.append(pl.BlockSpec(params["bias"].shape, lambda i: (0, 0)))

    out_cols = 1 if with_action else po
    out_shape = jax.ShapeDtypeStruct((b_pad, out_cols), jnp.float32)
    out_spec = pl.BlockSpec((tb, out_cols), lambda i: (i, 0))

    flops = 2 * b_pad * (n_in * pf + (pf * pf if two_layers else 0) + pf * po)
    bytes_accessed = sum(int(a.size) * a.dtype.itemsize for a in args) \
        + b_pad * out_cols * 4

    out = pl.pallas_call(
        _make_mlp_kernel(two_layers, with_action),
        grid=grid,
        in_specs=in_specs,
        out_specs=out_spec,
        out_shape=out_shape,
        compiler_params=pltpu.CompilerParams(
            dimension_semantics=("parallel",)),
        cost_estimate=pl.CostEstimate(
            flops=flops, transcendentals=0, bytes_accessed=bytes_accessed),
    )(*args)

    if with_action:
        # torch: q.gather(1, action).squeeze()  (squeeze collapses B==1 too)
        return jnp.squeeze(out[:batch])
    return out[:batch, :n_output]


# ------------------------- deterministic param init ------------------------


def _xavier_uniform(key, fan_in, fan_out, gain):
    bound = gain * float(jnp.sqrt(6.0 / (fan_in + fan_out)))
    # stored as [in, out] (transpose of torch's [out, in]); same distribution.
    return jax.random.uniform(key, (fan_in, fan_out), jnp.float32, -bound, bound)


def _bias_uniform(key, fan_in, fan_out):
    bound = 1.0 / float(jnp.sqrt(fan_in))
    return jax.random.uniform(key, (fan_out,), jnp.float32, -bound, bound)


def init_params(key, n_input, n_output, n_features, two_layers=True):
    """Params matching the torch init, stored lane-padded (zeros in padding)."""
    pf = _round_up(n_features, _LANE)
    po = _round_up(n_output, _LANE)
    pb = max(pf, po)
    relu_gain = float(jnp.sqrt(2.0))   # nn.init.calculate_gain('relu')
    k = jax.random.split(key, 6)

    w1 = jnp.zeros((n_input, pf), jnp.float32).at[:, :n_features].set(
        _xavier_uniform(k[0], n_input, n_features, relu_gain))
    wq = jnp.zeros((pf, po), jnp.float32).at[:n_features, :n_output].set(
        _xavier_uniform(k[4], n_features, n_output, 1.0))

    bias = jnp.zeros((3, pb), jnp.float32)
    bias = bias.at[0, :n_features].set(_bias_uniform(k[1], n_input, n_features))
    bias = bias.at[2, :n_output].set(_bias_uniform(k[5], n_features, n_output))

    params = {"w1": w1, "wq": wq}
    if two_layers:
        params["w2"] = jnp.zeros((pf, pf), jnp.float32).at[:n_features, :n_features].set(
            _xavier_uniform(k[2], n_features, n_features, relu_gain))
        bias = bias.at[1, :n_features].set(
            _bias_uniform(k[3], n_features, n_features))
    params["bias"] = bias
    return params


# ------------------------------ reference -----------------------------------


def _reference_forward(state, params, n_output, two_layers):
    hp = jax.lax.Precision.HIGHEST
    pf = params["w1"].shape[1]
    po = params["wq"].shape[1]
    h = jnp.maximum(jnp.dot(state, params["w1"], precision=hp)
                    + params["bias"][0, :pf], 0.0)
    if two_layers:
        h = jnp.maximum(jnp.dot(h, params["w2"], precision=hp)
                        + params["bias"][1, :pf], 0.0)
    q = jnp.dot(h, params["wq"], precision=hp) + params["bias"][2, :po]
    return q[:, :n_output]


# ----------------------------------- main -----------------------------------

if __name__ == "__main__":
    key = jax.random.PRNGKey(0)
    k_param, k_state, k_action, k_param1 = jax.random.split(key, 4)

    # Small shapes consistent with the module: input_shape=(32,), output_shape=(8,)
    batch, n_input, n_output, n_features = 8, 32, 8, 32

    state = jax.random.normal(k_state, (batch, n_input), jnp.float32)
    action = jax.random.randint(k_action, (batch, 1), 0, n_output)

    # --- two-layer config ---
    params = init_params(k_param, n_input, n_output, n_features, two_layers=True)

    q_all = network_forward(state, params, n_output=n_output, two_layers=True)
    jax.block_until_ready(q_all)
    assert q_all.shape == (batch, n_output)

    q_sel = network_forward(state, params, action, n_output=n_output, two_layers=True)
    jax.block_until_ready(q_sel)
    assert q_sel.shape == (batch,)

    q_ref = _reference_forward(state, params, n_output, True)
    assert jnp.allclose(q_all, q_ref, atol=1e-4, rtol=1e-4)
    q_sel_ref = jnp.squeeze(jnp.take_along_axis(q_ref, action, axis=1))
    assert jnp.allclose(q_sel, q_sel_ref, atol=1e-4, rtol=1e-4)

    # --- one-layer config (module default two_layers=False) ---
    params1 = init_params(k_param1, n_input, n_output, n_features, two_layers=False)
    q1 = network_forward(state, params1, action, n_output=n_output, two_layers=False)
    jax.block_until_ready(q1)
    q1_ref = jnp.squeeze(jnp.take_along_axis(
        _reference_forward(state, params1, n_output, False), action, axis=1))
    assert jnp.allclose(q1, q1_ref, atol=1e-4, rtol=1e-4)

    print("KERNEL_OK")
</pallas_src>

<mosaic_0001>
module attributes {stable_mosaic.version = 11 : i64} {
  func.func @kernel(%arg0: i32, %arg1: memref<8x32xf32, #tpu.memory_space<vmem>>, %arg2: memref<32x128xf32, #tpu.memory_space<vmem>>, %arg3: memref<128x128xf32, #tpu.memory_space<vmem>>, %arg4: memref<128x128xf32, #tpu.memory_space<vmem>>, %arg5: memref<3x128xf32, #tpu.memory_space<vmem>>, %arg6: memref<8x128xf32, #tpu.memory_space<vmem>>) attributes {dimension_semantics = [#tpu.dimension_semantics<parallel>], iteration_bounds = array<i64: 1>, scalar_prefetch = 0 : i64, scratch_operands = 0 : i64, tpu.core_type = #tpu.core_type<tc>, window_params = [{transform_indices = @transform_0, window_bounds = array<i64: 8, 32>}, {pipeline_mode = #tpu.pipeline_mode<synchronous>, transform_indices = @transform_1, window_bounds = array<i64: 32, 128>}, {pipeline_mode = #tpu.pipeline_mode<synchronous>, transform_indices = @transform_2, window_bounds = array<i64: 128, 128>}, {pipeline_mode = #tpu.pipeline_mode<synchronous>, transform_indices = @transform_3, window_bounds = array<i64: 128, 128>}, {pipeline_mode = #tpu.pipeline_mode<synchronous>, transform_indices = @transform_4, window_bounds = array<i64: 3, 128>}, {transform_indices = @transform_5, window_bounds = array<i64: 8, 128>}]} {
    %c0 = arith.constant 0 : index
    %c0_0 = arith.constant 0 : index
    %0 = vector.load %arg1[%c0, %c0_0] : memref<8x32xf32, #tpu.memory_space<vmem>>, vector<8x32xf32>
    %c0_1 = arith.constant 0 : index
    %c0_2 = arith.constant 0 : index
    %1 = vector.load %arg2[%c0_1, %c0_2] : memref<32x128xf32, #tpu.memory_space<vmem>>, vector<32x128xf32>
    %cst = arith.constant dense<0.000000e+00> : vector<8x128xf32>
    %2 = tpu.matmul %0, %1, %cst {dimension_numbers = #tpu.dot_dimension_numbers<[1], [0], [0], [1], [0, 0, 1, 1], [], []>} : vector<8x32xf32>, vector<32x128xf32>, vector<8x128xf32> -> vector<8x128xf32>
    %c0_3 = arith.constant 0 : index
    %c0_4 = arith.constant 0 : index
    %3 = vector.load %arg5[%c0_3, %c0_4] : memref<3x128xf32, #tpu.memory_space<vmem>>, vector<1x128xf32>
    %4 = vector.broadcast %3 : vector<1x128xf32> to vector<8x128xf32>
    %5 = arith.addf %2, %4 : vector<8x128xf32>
    %cst_5 = arith.constant 0.000000e+00 : f32
    %6 = vector.broadcast %cst_5 : f32 to vector<8x128xf32>
    %7 = arith.maximumf %5, %6 : vector<8x128xf32>
    %c0_6 = arith.constant 0 : index
    %c0_7 = arith.constant 0 : index
    %8 = vector.load %arg3[%c0_6, %c0_7] : memref<128x128xf32, #tpu.memory_space<vmem>>, vector<128x128xf32>
    %cst_8 = arith.constant dense<0.000000e+00> : vector<8x128xf32>
    %9 = tpu.matmul %7, %8, %cst_8 {dimension_numbers = #tpu.dot_dimension_numbers<[1], [0], [0], [1], [0, 0, 1, 1], [], []>} : vector<8x128xf32>, vector<128x128xf32>, vector<8x128xf32> -> vector<8x128xf32>
    %c1 = arith.constant 1 : index
    %c0_9 = arith.constant 0 : index
    %10 = vector.load %arg5[%c1, %c0_9] : memref<3x128xf32, #tpu.memory_space<vmem>>, vector<1x128xf32>
    %11 = vector.broadcast %10 : vector<1x128xf32> to vector<8x128xf32>
    %12 = arith.addf %9, %11 : vector<8x128xf32>
    %cst_10 = arith.constant 0.000000e+00 : f32
    %13 = vector.broadcast %cst_10 : f32 to vector<8x128xf32>
    %14 = arith.maximumf %12, %13 : vector<8x128xf32>
    %c0_11 = arith.constant 0 : index
    %c0_12 = arith.constant 0 : index
    %15 = vector.load %arg4[%c0_11, %c0_12] : memref<128x128xf32, #tpu.memory_space<vmem>>, vector<128x128xf32>
    %cst_13 = arith.constant dense<0.000000e+00> : vector<8x128xf32>
    %16 = tpu.matmul %14, %15, %cst_13 {dimension_numbers = #tpu.dot_dimension_numbers<[1], [0], [0], [1], [0, 0, 1, 1], [], []>} : vector<8x128xf32>, vector<128x128xf32>, vector<8x128xf32> -> vector<8x128xf32>
    %c2 = arith.constant 2 : index
    %c0_14 = arith.constant 0 : index
    %17 = vector.load %arg5[%c2, %c0_14] : memref<3x128xf32, #tpu.memory_space<vmem>>, vector<1x128xf32>
    %18 = vector.broadcast %17 : vector<1x128xf32> to vector<8x128xf32>
    %19 = arith.addf %16, %18 : vector<8x128xf32>
    %c0_15 = arith.constant 0 : index
    %c0_16 = arith.constant 0 : index
    %20 = vector.load %arg6[%c0_15, %c0_16] : memref<8x128xf32, #tpu.memory_space<vmem>>, vector<8x128xf32>
    tpu.vector_store %arg6[%c0_15, %c0_16], %19 {strides = array<i32>} : memref<8x128xf32, #tpu.memory_space<vmem>>, vector<8x128xf32>,
    return
  }
  func.func @transform_0(%arg0: i32) -> (i32, i32) {
    %c0_i32 = arith.constant 0 : i32
    %c0_i32_0 = arith.constant 0 : i32
    return %arg0, %c0_i32 : i32, i32
  }
  func.func @transform_1(%arg0: i32) -> (i32, i32) {
    %c0_i32 = arith.constant 0 : i32
    %c0_i32_0 = arith.constant 0 : i32
    %c0_i32_1 = arith.constant 0 : i32
    return %c0_i32, %c0_i32_0 : i32, i32
  }
  func.func @transform_2(%arg0: i32) -> (i32, i32) {
    %c0_i32 = arith.constant 0 : i32
    %c0_i32_0 = arith.constant 0 : i32
    %c0_i32_1 = arith.constant 0 : i32
    return %c0_i32, %c0_i32_0 : i32, i32
  }
  func.func @transform_3(%arg0: i32) -> (i32, i32) {
    %c0_i32 = arith.constant 0 : i32
    %c0_i32_0 = arith.constant 0 : i32
    %c0_i32_1 = arith.constant 0 : i32
    return %c0_i32, %c0_i32_0 : i32, i32
  }
  func.func @transform_4(%arg0: i32) -> (i32, i32) {
    %c0_i32 = arith.constant 0 : i32
    %c0_i32_0 = arith.constant 0 : i32
    %c0_i32_1 = arith.constant 0 : i32
    return %c0_i32, %c0_i32_0 : i32, i32
  }
  func.func @transform_5(%arg0: i32) -> (i32, i32) {
    %c0_i32 = arith.constant 0 : i32
    %c0_i32_0 = arith.constant 0 : i32
    return %arg0, %c0_i32 : i32, i32
  }
}

</mosaic_0001>

<llo_original>
// kernel: network_forward.1
$region0: #{network_forward.1}
  #allocation0 [shape = 'u32[]', space=smem, size = 0x4, offset = 0x4, fixed_abs, tag = 'smem constant byte address 0x4 - core index']
  #allocation1 [shape = 'u32[144,128]{1,0:T(1,128)}', space=vmem, size = 0x12000, scoped, tag = 'internal scratch']
  %s0 = inlined_call_operand.hbm [shape: f32[8,32], index: 0, kind: input, shape index: {}]
  %s1 = inlined_call_operand.hbm [shape: f32[32,128], index: 1, kind: input, shape index: {}]
  %s2 = inlined_call_operand.hbm [shape: f32[128,128], index: 2, kind: input, shape index: {}]
  %s3 = inlined_call_operand.hbm [shape: f32[128,128], index: 3, kind: input, shape index: {}]
  %s4 = inlined_call_operand.hbm [shape: f32[3,128], index: 4, kind: input, shape index: {}]
  %s5 = inlined_call_operand.hbm [shape: f32[8,128], index: 5, kind: output, shape index: {}]
  %s6 = sld [smem:[#allocation0]]
  $region50: #{network_forward.1} parent=0
    _
  %s8 = ssub.s32 1, %s6
  %s9 = scalar_select 0, %s8, %s6
  $region1: #{network_forward.1} parent=0
    #allocation2 [shape = 'u8[4096]{0}', space=vmem, size = 0x1000, scoped, tag = 'input window, operand 0, single buffered']
    #allocation3 [shape = 's32[1]{0}', space=sflag, size = 0x4, scoped, tag = 'scoped memory for network_forward.1']
    #allocation4 [shape = 's32[1]{0}', space=sflag, size = 0x4, scoped, tag = 'scoped memory for network_forward.1']
    #allocation5 [shape = 'u8[16384]{0}', space=vmem, size = 0x4000, scoped, tag = 'input window, operand 1, single buffered']
    #allocation6 [shape = 's32[1]{0}', space=sflag, size = 0x4, scoped, tag = 'scoped memory for network_forward.1']
    #allocation7 [shape = 'u8[65536]{0}', space=vmem, size = 0x10000, scoped, tag = 'input window, operand 2, single buffered']
    #allocation8 [shape = 'u8[65536]{0}', space=vmem, size = 0x10000, scoped, tag = 'input window, operand 3, single buffered']
    #allocation9 [shape = 's32[1]{0}', space=sflag, size = 0x4, scoped, tag = 'scoped memory for network_forward.1']
    #allocation10 [shape = 'u8[2048]{0}', space=vmem, size = 0x800, scoped, tag = 'input window, operand 4, single buffered']
    #allocation11 [shape = 'u8[4096]{0}', space=vmem, size = 0x1000, scoped, tag = 'output window, operand 0, single buffered']
    %10 = vsyncpa [#allocation3], 0
    %11 = vsyncpa [#allocation6], 0
    %12 = vsyncpa [#allocation9], 0
    %13 = vsyncpa [#allocation4], 0
    // Predicated region
    $region2: #{network_forward.1} parent=1 // pred_check
      _
    $region3: #{network_forward.1} parent=1 // pred_check_branch
      %15 = sbr.rel (0) target = $region5
    $region4: #{network_forward.1} parent=1 // pred_region
      %s17 = ssub.s32 128, 128
      %18 = vsyncadd [#allocation3], %s17
      %s20 = sshll.u32 [#allocation2], 4
      %s21 = int_to_ptr.vmem [resolvable:$true] %s20
      %23 = dma.hbm_to_vmem [thread:$0]  %s0, 128, %s21, [#allocation3]
    $region5: #{network_forward.1} parent=1 // pred_fallthru
      _
    // Predicated region
    $region6: #{network_forward.1} parent=1 // pred_check
      _
    $region7: #{network_forward.1} parent=1 // pred_check_branch
      %25 = sbr.rel (0) target = $region9
    $region8: #{network_forward.1} parent=1 // pred_region
      %s27 = ssub.s32 512, 512
      %28 = vsyncadd [#allocation6], %s27
      %s29 = sshll.u32 [#allocation5], 4
      %s30 = int_to_ptr.vmem [resolvable:$true] %s29
      %35 = dma.hbm_to_vmem [thread:$0]  %s1, 512, %s30, [#allocation6], 128, 128, 8
    $region9: #{network_forward.1} parent=1 // pred_fallthru
      _
    // Predicated region
    $region10: #{network_forward.1} parent=1 // pred_check
      _
    $region11: #{network_forward.1} parent=1 // pred_check_branch
      %37 = sbr.rel (0) target = $region13
    $region12: #{network_forward.1} parent=1 // pred_region
      %s39 = ssub.s32 2048, 2048
      %40 = vsyncadd [#allocation6], %s39
      %s41 = sshll.u32 [#allocation7], 4
      %s42 = int_to_ptr.vmem [resolvable:$true] %s41
      %47 = dma.hbm_to_vmem [thread:$0]  %s2, 2048, %s42, [#allocation6], 128, 128, 8
    $region13: #{network_forward.1} parent=1 // pred_fallthru
      _
    // Predicated region
    $region14: #{network_forward.1} parent=1 // pred_check
      _
    $region15: #{network_forward.1} parent=1 // pred_check_branch
      %49 = sbr.rel (0) target = $region17
    $region16: #{network_forward.1} parent=1 // pred_region
      %s51 = ssub.s32 2048, 2048
      %52 = vsyncadd [#allocation9], %s51
      %s53 = sshll.u32 [#allocation8], 4
      %s54 = int_to_ptr.vmem [resolvable:$true] %s53
      %59 = dma.hbm_to_vmem [thread:$0]  %s3, 2048, %s54, [#allocation9], 128, 128, 8
    $region17: #{network_forward.1} parent=1 // pred_fallthru
      _
    // Predicated region
    $region18: #{network_forward.1} parent=1 // pred_check
      _
    $region19: #{network_forward.1} parent=1 // pred_check_branch
      %61 = sbr.rel (0) target = $region21
    $region20: #{network_forward.1} parent=1 // pred_region
      %s63 = ssub.s32 64, 64
      %64 = vsyncadd [#allocation9], %s63
      %s66 = sshll.u32 [#allocation10], 4
      %s67 = int_to_ptr.vmem [resolvable:$true] %s66
      %69 = dma.hbm_to_vmem [thread:$0]  %s4, 64, %s67, [#allocation9]
    $region21: #{network_forward.1} parent=1 // pred_fallthru
      _
    // Predicated region
    $region22: #{network_forward.1} parent=1 // pred_check
      _
    $region23: #{network_forward.1} parent=1 // pred_check_branch
      %71 = sbr.rel (0) target = $region25
    $region24: #{network_forward.1} parent=1 // pred_region
      %72 = dma.done [#allocation3], 128
    $region25: #{network_forward.1} parent=1 // pred_fallthru
      _
    // Predicated region
    $region26: #{network_forward.1} parent=1 // pred_check
      _
    $region27: #{network_forward.1} parent=1 // pred_check_branch
      %74 = sbr.rel (0) target = $region29
    $region28: #{network_forward.1} parent=1 // pred_region
      %75 = dma.done [#allocation6], 512
    $region29: #{network_forward.1} parent=1 // pred_fallthru
      _
    // Predicated region
    $region30: #{network_forward.1} parent=1 // pred_check
      _
    $region31: #{network_forward.1} parent=1 // pred_check_branch
      %77 = sbr.rel (0) target = $region33
    $region32: #{network_forward.1} parent=1 // pred_region
      %78 = dma.done [#allocation6], 2048
    $region33: #{network_forward.1} parent=1 // pred_fallthru
      _
    // Predicated region
    $region34: #{network_forward.1} parent=1 // pred_check
      _
    $region35: #{network_forward.1} parent=1 // pred_check_branch
      %80 = sbr.rel (0) target = $region37
    $region36: #{network_forward.1} parent=1 // pred_region
      %81 = dma.done [#allocation9], 2048
    $region37: #{network_forward.1} parent=1 // pred_fallthru
      _
    // Predicated region
    $region38: #{network_forward.1} parent=1 // pred_check
      _
    $region39: #{network_forward.1} parent=1 // pred_check_branch
      %83 = sbr.rel (0) target = $region41
    $region40: #{network_forward.1} parent=1 // pred_region
      %84 = dma.done [#allocation9], 64
    $region41: #{network_forward.1} parent=1 // pred_fallthru
      _
    %v85 = vld [vmem:[#allocation2] sm:$0xff]
    %v86 = vld [vmem:[#allocation5] sm:$0xff]
    %v87 = vld [vmem:[#allocation5 + $0x8] sm:$0xff]
    %v88 = vld [vmem:[#allocation5 + $0x10] sm:$0xff]
    %v89 = vld [vmem:[#allocation5 + $0x18] sm:$0xff]
    %v90 = vld [vmem:[#allocation10] sm:$0x1]
    %v91 = vlaneseq
    %v92 = vshrl.u32 %v91, 7
    %v93 = vsub.s32 0, %v92
    %v94 = vrot.slane %v90, %v93
    %vm95 = vcmask 261120
    %v97 = vsel %vm95, %v85, 0
    %99 = vmatprep.subr.mxu0 0.0
    %100 = vmatpush1.msra.mxu0 %v86
    %101 = vmatprep.subr.mxu0 0.0
    %102 = vmatpush1.msra.mxu0 %v87
    %103 = vmatprep.subr.mxu0 0.0
    %104 = vmatpush1.msra.mxu0 %v88
    %105 = vmatprep.subr.mxu0 0.0
    %106 = vmatpush1.msra.mxu0 %v89
    %107 = vmatprep.subr.mxu0 0.0
    %108 = vmatpush1.msra.mxu0 0.0
    %109 = vmatprep.subr.mxu0 0.0
    %110 = vmatpush1.msra.mxu0 0.0
    %111 = vmatprep.subr.mxu0 0.0
    %112 = vmatpush1.msra.mxu0 0.0
    %113 = vmatprep.subr.mxu0 0.0
    %114 = vmatpush1.msra.mxu0 0.0
    %115 = vmatprep.subr.mxu0 0.0
    %116 = vmatpush1.msra.mxu0 0.0
    %117 = vmatprep.subr.mxu0 0.0
    %118 = vmatpush1.msra.mxu0 0.0
    %119 = vmatprep.subr.mxu0 0.0
    %120 = vmatpush1.msra.mxu0 0.0
    %121 = vmatprep.subr.mxu0 0.0
    %122 = vmatpush1.msra.mxu0 0.0
    %123 = vmatprep.subr.mxu0 0.0
    %124 = vmatpush1.msra.mxu0 0.0
    %125 = vmatprep.subr.mxu0 0.0
    %126 = vmatpush1.msra.mxu0 0.0
    %127 = vmatprep.subr.mxu0 0.0
    %128 = vmatpush1.msra.mxu0 0.0
    %129 = vmatprep.subr.mxu0 0.0
    %130 = vmatpush1.msra.mxu0 0.0
    %131 = vmatprep.subr.mxu0 0.0
    %132 = vmatpush1.msra.mxu0 0.0
    %133 = vmatprep.subr.mxu0 0.0
    %134 = vmatpush1.msra.mxu0 0.0
    %135 = vmatprep.subr.mxu0 0.0
    %136 = vmatpush1.msra.mxu0 0.0
    %137 = vmatprep.subr.mxu0 0.0
    %138 = vmatpush1.msra.mxu0 0.0
    %139 = vmatprep.subr.mxu0 0.0
    %140 = vmatpush1.msra.mxu0 0.0
    %141 = vmatprep.subr.mxu0 0.0
    %142 = vmatpush1.msra.mxu0 0.0
    %143 = vmatprep.subr.mxu0 0.0
    %144 = vmatpush1.msra.mxu0 0.0
    %145 = vmatprep.subr.mxu0 0.0
    %146 = vmatpush1.msra.mxu0 0.0
    %147 = vmatprep.subr.mxu0 0.0
    %148 = vmatpush1.msra.mxu0 0.0
    %149 = vmatprep.subr.mxu0 0.0
    %150 = vmatpush1.msra.mxu0 0.0
    %151 = vmatprep.subr.mxu0 0.0
    %152 = vmatpush1.msra.mxu0 0.0
    %153 = vmatprep.subr.mxu0 0.0
    %154 = vmatpush1.msra.mxu0 0.0
    %155 = vmatprep.subr.mxu0 0.0
    %156 = vmatpush1.msra.mxu0 0.0
    %157 = vmatprep.subr.mxu0 0.0
    %158 = vmatpush1.msra.mxu0 0.0
    %159 = vmatprep.subr.mxu0 0.0
    %160 = vmatpush1.msra.mxu0 0.0
    %161 = vmatprep.subr.mxu0 0.0
    %162 = vmatpush1.msra.mxu0 0.0
    %163 = vmatprep.mubr.f32.mxu0 0.0
    %164 = vmatmul.mubr.f32.gmra.mrb[0].mxu0 %v97
    %v165 = vpop.f32.mrb[0].mxu0
    %v166 = vadd.f32 %v94, %v165
    %v167 = vpop.f32.mrb[0].mxu0
    %168 = vdwg.mxu0
    %v169 = vmax.f32 %v166, 0.0
    %v170 = vld [vmem:[#allocation7] sm:$0xff]
    %v171 = vld [vmem:[#allocation7 + $0x8] sm:$0xff]
    %v172 = vld [vmem:[#allocation7 + $0x10] sm:$0xff]
    %v173 = vld [vmem:[#allocation7 + $0x18] sm:$0xff]
    %v174 = vld [vmem:[#allocation7 + $0x20] sm:$0xff]
    %v175 = vld [vmem:[#allocation7 + $0x28] sm:$0xff]
    %v176 = vld [vmem:[#allocation7 + $0x30] sm:$0xff]
    %v177 = vld [vmem:[#allocation7 + $0x38] sm:$0xff]
    %v178 = vld [vmem:[#allocation7 + $0x40] sm:$0xff]
    %v179 = vld [vmem:[#allocation7 + $0x48] sm:$0xff]
    %v180 = vld [vmem:[#allocation7 + $0x50] sm:$0xff]
    %v181 = vld [vmem:[#allocation7 + $0x58] sm:$0xff]
    %v182 = vld [vmem:[#allocation7 + $0x60] sm:$0xff]
    %v183 = vld [vmem:[#allocation7 + $0x68] sm:$0xff]
    %v184 = vld [vmem:[#allocation7 + $0x70] sm:$0xff]
    %v185 = vld [vmem:[#allocation7 + $0x78] sm:$0xff]
    %v186 = vld [vmem:[#allocation10 + $0x1] sm:$0x1]
    %v187 = vlaneseq
    %v188 = vshrl.u32 %v187, 7
    %v189 = vsub.s32 0, %v188
    %v190 = vrot.slane %v186, %v189
    %191 = vmatprep.subr.mxu0 0.0
    %192 = vmatpush1.msra.mxu0 %v170
    %193 = vmatprep.subr.mxu0 0.0
    %194 = vmatpush1.msra.mxu0 %v171
    %195 = vmatprep.subr.mxu0 0.0
    %196 = vmatpush1.msra.mxu0 %v172
    %197 = vmatprep.subr.mxu0 0.0
    %198 = vmatpush1.msra.mxu0 %v173
    %199 = vmatprep.subr.mxu0 0.0
    %200 = vmatpush1.msra.mxu0 %v174
    %201 = vmatprep.subr.mxu0 0.0
    %202 = vmatpush1.msra.mxu0 %v175
    %203 = vmatprep.subr.mxu0 0.0
    %204 = vmatpush1.msra.mxu0 %v176
    %205 = vmatprep.subr.mxu0 0.0
    %206 = vmatpush1.msra.mxu0 %v177
    %207 = vmatprep.subr.mxu0 0.0
    %208 = vmatpush1.msra.mxu0 %v178
    %209 = vmatprep.subr.mxu0 0.0
    %210 = vmatpush1.msra.mxu0 %v179
    %211 = vmatprep.subr.mxu0 0.0
    %212 = vmatpush1.msra.mxu0 %v180
    %213 = vmatprep.subr.mxu0 0.0
    %214 = vmatpush1.msra.mxu0 %v181
    %215 = vmatprep.subr.mxu0 0.0
    %216 = vmatpush1.msra.mxu0 %v182
    %217 = vmatprep.subr.mxu0 0.0
    %218 = vmatpush1.msra.mxu0 %v183
    %219 = vmatprep.subr.mxu0 0.0
    %220 = vmatpush1.msra.mxu0 %v184
    %221 = vmatprep.subr.mxu0 0.0
    %222 = vmatpush1.msra.mxu0 %v185
    %223 = vmatprep.subr.mxu0 0.0
    %224 = vmatpush1.msra.mxu0 0.0
    %225 = vmatprep.subr.mxu0 0.0
    %226 = vmatpush1.msra.mxu0 0.0
    %227 = vmatprep.subr.mxu0 0.0
    %228 = vmatpush1.msra.mxu0 0.0
    %229 = vmatprep.subr.mxu0 0.0
    %230 = vmatpush1.msra.mxu0 0.0
    %231 = vmatprep.subr.mxu0 0.0
    %232 = vmatpush1.msra.mxu0 0.0
    %233 = vmatprep.subr.mxu0 0.0
    %234 = vmatpush1.msra.mxu0 0.0
    %235 = vmatprep.subr.mxu0 0.0
    %236 = vmatpush1.msra.mxu0 0.0
    %237 = vmatprep.subr.mxu0 0.0
    %238 = vmatpush1.msra.mxu0 0.0
    %239 = vmatprep.subr.mxu0 0.0
    %240 = vmatpush1.msra.mxu0 0.0
    %241 = vmatprep.subr.mxu0 0.0
    %242 = vmatpush1.msra.mxu0 0.0
    %243 = vmatprep.subr.mxu0 0.0
    %244 = vmatpush1.msra.mxu0 0.0
    %245 = vmatprep.subr.mxu0 0.0
    %246 = vmatpush1.msra.mxu0 0.0
    %247 = vmatprep.subr.mxu0 0.0
    %248 = vmatpush1.msra.mxu0 0.0
    %249 = vmatprep.subr.mxu0 0.0
    %250 = vmatpush1.msra.mxu0 0.0
    %251 = vmatprep.subr.mxu0 0.0
    %252 = vmatpush1.msra.mxu0 0.0
    %253 = vmatprep.subr.mxu0 0.0
    %254 = vmatpush1.msra.mxu0 0.0
    %255 = vmatprep.mubr.f32.mxu0 0.0
    %256 = vmatmul.mubr.f32.gmra.mrb[0].mxu0 %v169
    %v257 = vpop.f32.mrb[0].mxu0
    %v258 = vadd.f32 %v190, %v257
    %v259 = vpop.f32.mrb[0].mxu0
    %260 = vdwg.mxu0
    %v261 = vmax.f32 %v258, 0.0
    %v262 = vld [vmem:[#allocation8] sm:$0xff]
    %v263 = vld [vmem:[#allocation8 + $0x8] sm:$0xff]
    %v264 = vld [vmem:[#allocation8 + $0x10] sm:$0xff]
    %v265 = vld [vmem:[#allocation8 + $0x18] sm:$0xff]
    %v266 = vld [vmem:[#allocation8 + $0x20] sm:$0xff]
    %v267 = vld [vmem:[#allocation8 + $0x28] sm:$0xff]
    %v268 = vld [vmem:[#allocation8 + $0x30] sm:$0xff]
    %v269 = vld [vmem:[#allocation8 + $0x38] sm:$0xff]
    %v270 = vld [vmem:[#allocation8 + $0x40] sm:$0xff]
    %v271 = vld [vmem:[#allocation8 + $0x48] sm:$0xff]
    %v272 = vld [vmem:[#allocation8 + $0x50] sm:$0xff]
    %v273 = vld [vmem:[#allocation8 + $0x58] sm:$0xff]
    %v274 = vld [vmem:[#allocation8 + $0x60] sm:$0xff]
    %v275 = vld [vmem:[#allocation8 + $0x68] sm:$0xff]
    %v276 = vld [vmem:[#allocation8 + $0x70] sm:$0xff]
    %v277 = vld [vmem:[#allocation8 + $0x78] sm:$0xff]
    %v278 = vld [vmem:[#allocation10 + $0x2] sm:$0x1]
    %v279 = vlaneseq
    %v280 = vshrl.u32 %v279, 7
    %v281 = vsub.s32 0, %v280
    %v282 = vrot.slane %v278, %v281
    %283 = vmatprep.subr.mxu0 0.0
    %284 = vmatpush1.msra.mxu0 %v262
    %285 = vmatprep.subr.mxu0 0.0
    %286 = vmatpush1.msra.mxu0 %v263
    %287 = vmatprep.subr.mxu0 0.0
    %288 = vmatpush1.msra.mxu0 %v264
    %289 = vmatprep.subr.mxu0 0.0
    %290 = vmatpush1.msra.mxu0 %v265
    %291 = vmatprep.subr.mxu0 0.0
    %292 = vmatpush1.msra.mxu0 %v266
    %293 = vmatprep.subr.mxu0 0.0
    %294 = vmatpush1.msra.mxu0 %v267
    %295 = vmatprep.subr.mxu0 0.0
    %296 = vmatpush1.msra.mxu0 %v268
    %297 = vmatprep.subr.mxu0 0.0
    %298 = vmatpush1.msra.mxu0 %v269
    %299 = vmatprep.subr.mxu0 0.0
    %300 = vmatpush1.msra.mxu0 %v270
    %301 = vmatprep.subr.mxu0 0.0
    %302 = vmatpush1.msra.mxu0 %v271
    %303 = vmatprep.subr.mxu0 0.0
    %304 = vmatpush1.msra.mxu0 %v272
    %305 = vmatprep.subr.mxu0 0.0
    %306 = vmatpush1.msra.mxu0 %v273
    %307 = vmatprep.subr.mxu0 0.0
    %308 = vmatpush1.msra.mxu0 %v274
    %309 = vmatprep.subr.mxu0 0.0
    %310 = vmatpush1.msra.mxu0 %v275
    %311 = vmatprep.subr.mxu0 0.0
    %312 = vmatpush1.msra.mxu0 %v276
    %313 = vmatprep.subr.mxu0 0.0
    %314 = vmatpush1.msra.mxu0 %v277
    %315 = vmatprep.subr.mxu0 0.0
    %316 = vmatpush1.msra.mxu0 0.0
    %317 = vmatprep.subr.mxu0 0.0
    %318 = vmatpush1.msra.mxu0 0.0
    %319 = vmatprep.subr.mxu0 0.0
    %320 = vmatpush1.msra.mxu0 0.0
    %321 = vmatprep.subr.mxu0 0.0
    %322 = vmatpush1.msra.mxu0 0.0
    %323 = vmatprep.subr.mxu0 0.0
    %324 = vmatpush1.msra.mxu0 0.0
    %325 = vmatprep.subr.mxu0 0.0
    %326 = vmatpush1.msra.mxu0 0.0
    %327 = vmatprep.subr.mxu0 0.0
    %328 = vmatpush1.msra.mxu0 0.0
    %329 = vmatprep.subr.mxu0 0.0
    %330 = vmatpush1.msra.mxu0 0.0
    %331 = vmatprep.subr.mxu0 0.0
    %332 = vmatpush1.msra.mxu0 0.0
    %333 = vmatprep.subr.mxu0 0.0
    %334 = vmatpush1.msra.mxu0 0.0
    %335 = vmatprep.subr.mxu0 0.0
    %336 = vmatpush1.msra.mxu0 0.0
    %337 = vmatprep.subr.mxu0 0.0
    %338 = vmatpush1.msra.mxu0 0.0
    %339 = vmatprep.subr.mxu0 0.0
    %340 = vmatpush1.msra.mxu0 0.0
    %341 = vmatprep.subr.mxu0 0.0
    %342 = vmatpush1.msra.mxu0 0.0
    %343 = vmatprep.subr.mxu0 0.0
    %344 = vmatpush1.msra.mxu0 0.0
    %345 = vmatprep.subr.mxu0 0.0
    %346 = vmatpush1.msra.mxu0 0.0
    %347 = vmatprep.mubr.f32.mxu0 0.0
    %348 = vmatmul.mubr.f32.gmra.mrb[0].mxu0 %v261
    %v349 = vpop.f32.mrb[0].mxu0
    %v350 = vadd.f32 %v282, %v349
    %v351 = vpop.f32.mrb[0].mxu0
    %352 = vdwg.mxu0
    %353 = vst [vmem:[#allocation11] sm:$0xff] %v350
    // Predicated region
    $region42: #{network_forward.1} parent=1 // pred_check
      _
    $region43: #{network_forward.1} parent=1 // pred_check_branch
      %355 = sbr.rel (0) target = $region45
    $region44: #{network_forward.1} parent=1 // pred_region
      %s357 = ssub.s32 128, 128
      %358 = vsyncadd [#allocation4], %s357
      %s360 = sshll.u32 [#allocation11], 4
      %s361 = int_to_ptr.vmem [resolvable:$true] %s360
      %363 = dma.vmem_to_hbm [thread:$0]  %s361, 128, %s5, [#allocation4]
    $region45: #{network_forward.1} parent=1 // pred_fallthru
      _
    // Predicated region
    $region46: #{network_forward.1} parent=1 // pred_check
      _
    $region47: #{network_forward.1} parent=1 // pred_check_branch
      %365 = sbr.rel (0) target = $region49
    $region48: #{network_forward.1} parent=1 // pred_region
      %366 = dma.done [#allocation4], 128
    $region49: #{network_forward.1} parent=1 // pred_fallthru
      _
    %367 = vsyncpa [#allocation3], 1
    %368 = vsyncpa [#allocation6], 1
    %369 = vsyncpa [#allocation9], 1
    %370 = vsyncpa [#allocation4], 1

</llo_original>
